<compile_context>
chip_gen: v5e
topology: v5e:2x2
jax: 0.10.0
libtpu: 0.0.40
codegen_flags: <defaults>
</compile_context>

<pallas_src>
import functools

import jax
import jax.numpy as jnp
from jax.experimental import pallas as pl
from jax.experimental.pallas import tpu as pltpu


def _actor_kernel(state_ref, w1_ref, b1_ref, w2_ref, b2_ref,
                  wh_ref, bh_ref, out_ref, *, max_action, action_dim):
    """Fused ActorNet forward for one (tb, state_dim) batch tile.

    out_ref is a packed (tb, 2*action_dim) slab: columns [:A] hold mean,
    columns [A:] hold std. Packing both A-wide heads into one slab makes the
    head matmul a single MXU pass and the writeback one store stream.
    """
    # Cast to the MXU input dtype in-kernel (free on the VPU under MXU slack;
    # keeps the HBM->VMEM state stream at its original 4 B/elem f32 width
    # without an extra wrapper-side cast kernel).
    x = state_ref[...].astype(w1_ref.dtype)                      # (tb, S)

    # Layer 1: Linear + ReLU  (MXU matmul, f32 accumulation; VPU max)
    h1 = jnp.dot(x, w1_ref[...], preferred_element_type=jnp.float32)
    h1 = jnp.maximum(h1 + b1_ref[...], 0.0)

    # Layer 2: Linear + ReLU  (re-narrow activations to MXU input dtype)
    h2 = jnp.dot(h1.astype(w2_ref.dtype), w2_ref[...],
                 preferred_element_type=jnp.float32)
    h2 = jnp.maximum(h2 + b2_ref[...], 0.0)

    # Fused heads: one (tb, 2A) matmul instead of two (tb, A) matmuls.
    # wh is always f32 (negligible FLOPs, protects exp()-amplified std error).
    z = jnp.dot(h2.astype(wh_ref.dtype), wh_ref[...],
                preferred_element_type=jnp.float32) + bh_ref[...]

    # mean columns [:A]: max_action * tanh(z)   (EUP tanh, VPU mul)
    # std  columns [A:]: exp(clamp(z, -20, 2))  (EUP exp)
    # Compute both over the slab (same padded vregs) and lane-select.
    mean_all = max_action * jnp.tanh(z)
    std_all = jnp.exp(jnp.clip(z, -20.0, 2.0))
    col = jax.lax.broadcasted_iota(jnp.int32, z.shape, 1)
    out_ref[...] = jnp.where(col < action_dim, mean_all, std_all).astype(
        out_ref.dtype)


# Batch-tile cap: h1/h2 are tb*H*4 B each and are the only things that grow
# with tb. At H=128 a 4096-row tile keeps them at ~2 MiB each — comfortably
# inside v7x's 64 MiB VMEM and the 32 MiB scoped default on all parts.
_TB_CAP = 4096


def _choose_tb(B, core_parallel=False):
    """Single whole-batch step by default (amortizes ~0.35 us/step overhead
    on single-TC v5e/v6e); >= 2 steps only when core_parallel is requested
    (v7x megacore); always capped so (tb, H) intermediates fit VMEM."""
    if core_parallel and B % 16 == 0:
        half = B // 2
        if half <= _TB_CAP:
            return half          # exactly one tile per TensorCore
        for cand in range(_TB_CAP, 7, -8):
            if B % cand == 0 and (B // cand) % 2 == 0:
                return cand
    if B <= _TB_CAP or B % 8 != 0:
        return B
    for cand in range(_TB_CAP, 7, -8):
        if B % cand == 0:
            return cand
    return B


def prepare_actor_params(params, compute_dtype=jnp.bfloat16):
    """One-time parameter prep (hoisted out of the per-call wrapper):
    concatenate the two A-wide heads into one lane-dense (H, 2A) matrix and
    cast the big weights to the MXU input dtype. Biases and head weights stay
    float32 (f32-accumulating matmul + exp() accuracy)."""
    return {
        "w1": params["w1"].astype(compute_dtype),
        "b1": params["b1"].astype(jnp.float32),
        "w2": params["w2"].astype(compute_dtype),
        "b2": params["b2"].astype(jnp.float32),
        "wh": jnp.concatenate([params["wm"], params["ws"]], axis=1)
                 .astype(jnp.float32),
        "bh": jnp.concatenate([params["bm"], params["bs"]], axis=1)
                 .astype(jnp.float32),
    }


def actor_net_forward(state, prepped, *, max_action=1.0, tb=None,
                      core_parallel=False, return_packed=False):
    """ActorNet forward on TPU via one fused Pallas kernel.

    state:   (B, state_dim) float32 (cast to the MXU dtype happens in-kernel).
    prepped: output of prepare_actor_params().
    core_parallel: set True on v7x to shard the batch grid axis across both
             TensorCores via pltpu.CORE_PARALLEL (single-TC parts should
             leave this False and take one whole-batch grid step).
    return_packed: if True, return the packed (B, 2A) slab (mean | std)
             and skip the two post-kernel slice launches.

    Returns (mean, std), both (B, action_dim) float32, or the packed slab.
    """
    B, S = state.shape
    H = prepped["w1"].shape[1]
    A = prepped["wh"].shape[1] // 2

    if tb is None:
        tb = _choose_tb(B, core_parallel)
    if B % tb != 0:
        raise ValueError(f"tb={tb} must divide batch size B={B}")
    if tb != B and tb % 8 != 0:
        raise ValueError(f"tb={tb} must be a multiple of 8 (sublane tiling) "
                         "or equal to the full batch")

    kernel = functools.partial(_actor_kernel,
                               max_action=float(max_action), action_dim=A)

    grid = (B // tb,)
    if core_parallel and grid[0] > 1:
        semantics = (pltpu.CORE_PARALLEL,)
    else:
        semantics = ("arbitrary",)   # "parallel" is a codegen no-op; be honest

    # Weights/biases: full-array blocks, identical for every grid step.
    full = lambda shape: pl.BlockSpec(shape, lambda i: (0, 0))

    out = pl.pallas_call(
        kernel,
        out_shape=jax.ShapeDtypeStruct((B, 2 * A), jnp.float32),
        grid_spec=pltpu.PrefetchScalarGridSpec(
            num_scalar_prefetch=0,
            grid=grid,
            in_specs=[
                pl.BlockSpec((tb, S), lambda i: (i, 0)),   # state tile (f32)
                full((S, H)), full((1, H)),                # layer 1
                full((H, H)), full((1, H)),                # layer 2
                full((H, 2 * A)), full((1, 2 * A)),        # fused heads (f32)
            ],
            out_specs=pl.BlockSpec((tb, 2 * A), lambda i: (i, 0)),
        ),
        compiler_params=pltpu.CompilerParams(
            dimension_semantics=semantics,
        ),
    )(state, prepped["w1"], prepped["b1"], prepped["w2"], prepped["b2"],
      prepped["wh"], prepped["bh"])

    if return_packed:
        return out
    return out[:, :A], out[:, A:]


def init_actor_params(key, state_dim, action_dim, hidden_dim=128):
    """Deterministic synthetic init mirroring the PyTorch module's shapes.

    PyTorch: weight ~ N(0, 0.1); bias left at default (here: N(0, 0.1) too,
    deterministic — this is a synthetic kernel, not a checkpoint load).
    Weights are stored transposed, i.e. (in_features, out_features).
    """
    ks = jax.random.split(key, 8)
    n = lambda k, shape: (0.1 * jax.random.normal(k, shape)).astype(jnp.float32)
    return {
        "w1": n(ks[0], (state_dim, hidden_dim)),
        "b1": n(ks[1], (1, hidden_dim)),
        "w2": n(ks[2], (hidden_dim, hidden_dim)),
        "b2": n(ks[3], (1, hidden_dim)),
        "wm": n(ks[4], (hidden_dim, action_dim)),
        "bm": n(ks[5], (1, action_dim)),
        "ws": n(ks[6], (hidden_dim, action_dim)),
        "bs": n(ks[7], (1, action_dim)),
    }


def _reference_forward(state, params, max_action=1.0):
    """Pure-JAX reference matching the PyTorch forward (all f32)."""
    h1 = jax.nn.relu(state @ params["w1"] + params["b1"])
    h2 = jax.nn.relu(h1 @ params["w2"] + params["b2"])
    mean = max_action * jnp.tanh(h2 @ params["wm"] + params["bm"])
    log_std = jnp.clip(h2 @ params["ws"] + params["bs"], -20.0, 2.0)
    return mean, jnp.exp(log_std)


if __name__ == "__main__":
    # Small shapes consistent with the module: batch=8, state_dim=16,
    # hidden_dim=32, action_dim=8, max_action=1.0.
    B, STATE_DIM, HIDDEN_DIM, ACTION_DIM = 8, 16, 32, 8
    MAX_ACTION = 1.0

    key = jax.random.PRNGKey(0)
    k_params, k_state, k_state2 = jax.random.split(key, 3)
    params = init_actor_params(k_params, STATE_DIM, ACTION_DIM, HIDDEN_DIM)
    state = jax.random.normal(k_state, (B, STATE_DIM), dtype=jnp.float32)
    ref_mean, ref_std = _reference_forward(state, params, MAX_ACTION)

    # 1) f32 MXU-input path: strict check against the pure-JAX reference.
    prepped_f32 = prepare_actor_params(params, compute_dtype=jnp.float32)
    mean32, std32 = actor_net_forward(state, prepped_f32,
                                      max_action=MAX_ACTION)
    jax.block_until_ready((mean32, std32))
    assert mean32.shape == (B, ACTION_DIM) and std32.shape == (B, ACTION_DIM)
    assert jnp.allclose(mean32, ref_mean, atol=1e-5, rtol=1e-5)
    assert jnp.allclose(std32, ref_std, atol=1e-5, rtol=1e-5)

    # 2) Default bf16 MXU-input path (heads still f32): loose check vs f32 ref.
    prepped_bf16 = prepare_actor_params(params, compute_dtype=jnp.bfloat16)
    mean16, std16 = actor_net_forward(state, prepped_bf16,
                                      max_action=MAX_ACTION)
    jax.block_until_ready((mean16, std16))
    assert jnp.allclose(mean16, ref_mean, atol=5e-2, rtol=5e-2)
    assert jnp.allclose(std16, ref_std, atol=5e-2, rtol=5e-2)

    # 3) Multi-step grid path (explicit tb), and the packed-slab return path.
    B2 = 64
    state2 = jax.random.normal(k_state2, (B2, STATE_DIM), dtype=jnp.float32)
    packed = actor_net_forward(state2, prepped_f32, max_action=MAX_ACTION,
                               tb=32, return_packed=True)
    jax.block_until_ready(packed)
    ref_mean2, ref_std2 = _reference_forward(state2, params, MAX_ACTION)
    assert packed.shape == (B2, 2 * ACTION_DIM)
    assert jnp.allclose(packed[:, :ACTION_DIM], ref_mean2, atol=1e-5, rtol=1e-5)
    assert jnp.allclose(packed[:, ACTION_DIM:], ref_std2, atol=1e-5, rtol=1e-5)

    print("KERNEL_OK")
</pallas_src>

<mosaic_0001>
module attributes {stable_mosaic.version = 11 : i64} {
  func.func @_actor_kernel(%arg0: i32, %arg1: memref<8x16xf32, #tpu.memory_space<vmem>>, %arg2: memref<16x32xf32, #tpu.memory_space<vmem>>, %arg3: memref<1x32xf32, #tpu.memory_space<vmem>>, %arg4: memref<32x32xf32, #tpu.memory_space<vmem>>, %arg5: memref<1x32xf32, #tpu.memory_space<vmem>>, %arg6: memref<32x16xf32, #tpu.memory_space<vmem>>, %arg7: memref<1x16xf32, #tpu.memory_space<vmem>>, %arg8: memref<8x16xf32, #tpu.memory_space<vmem>>) attributes {dimension_semantics = [#tpu.dimension_semantics<arbitrary>], iteration_bounds = array<i64: 1>, scalar_prefetch = 0 : i64, scratch_operands = 0 : i64, tpu.core_type = #tpu.core_type<tc>, window_params = [{transform_indices = @transform_0, window_bounds = array<i64: 8, 16>}, {pipeline_mode = #tpu.pipeline_mode<synchronous>, transform_indices = @transform_1, window_bounds = array<i64: 16, 32>}, {pipeline_mode = #tpu.pipeline_mode<synchronous>, transform_indices = @transform_2, window_bounds = array<i64: 1, 32>}, {pipeline_mode = #tpu.pipeline_mode<synchronous>, transform_indices = @transform_3, window_bounds = array<i64: 32, 32>}, {pipeline_mode = #tpu.pipeline_mode<synchronous>, transform_indices = @transform_4, window_bounds = array<i64: 1, 32>}, {pipeline_mode = #tpu.pipeline_mode<synchronous>, transform_indices = @transform_5, window_bounds = array<i64: 32, 16>}, {pipeline_mode = #tpu.pipeline_mode<synchronous>, transform_indices = @transform_6, window_bounds = array<i64: 1, 16>}, {transform_indices = @transform_7, window_bounds = array<i64: 8, 16>}]} {
    %c0 = arith.constant 0 : index
    %c0_0 = arith.constant 0 : index
    %0 = vector.load %arg1[%c0, %c0_0] : memref<8x16xf32, #tpu.memory_space<vmem>>, vector<8x16xf32>
    %c0_1 = arith.constant 0 : index
    %c0_2 = arith.constant 0 : index
    %1 = vector.load %arg2[%c0_1, %c0_2] : memref<16x32xf32, #tpu.memory_space<vmem>>, vector<16x32xf32>
    %cst = arith.constant dense<0.000000e+00> : vector<8x32xf32>
    %2 = tpu.matmul %0, %1, %cst {dimension_numbers = #tpu.dot_dimension_numbers<[1], [0], [0], [1], [0, 0, 1, 1], [], []>} : vector<8x16xf32>, vector<16x32xf32>, vector<8x32xf32> -> vector<8x32xf32>
    %c0_3 = arith.constant 0 : index
    %c0_4 = arith.constant 0 : index
    %3 = vector.load %arg3[%c0_3, %c0_4] : memref<1x32xf32, #tpu.memory_space<vmem>>, vector<1x32xf32>
    %4 = vector.broadcast %3 : vector<1x32xf32> to vector<8x32xf32>
    %5 = arith.addf %2, %4 : vector<8x32xf32>
    %cst_5 = arith.constant 0.000000e+00 : f32
    %6 = vector.broadcast %cst_5 : f32 to vector<8x32xf32>
    %7 = arith.maximumf %5, %6 : vector<8x32xf32>
    %c0_6 = arith.constant 0 : index
    %c0_7 = arith.constant 0 : index
    %8 = vector.load %arg4[%c0_6, %c0_7] : memref<32x32xf32, #tpu.memory_space<vmem>>, vector<32x32xf32>
    %cst_8 = arith.constant dense<0.000000e+00> : vector<8x32xf32>
    %9 = tpu.matmul %7, %8, %cst_8 {dimension_numbers = #tpu.dot_dimension_numbers<[1], [0], [0], [1], [0, 0, 1, 1], [], []>} : vector<8x32xf32>, vector<32x32xf32>, vector<8x32xf32> -> vector<8x32xf32>
    %c0_9 = arith.constant 0 : index
    %c0_10 = arith.constant 0 : index
    %10 = vector.load %arg5[%c0_9, %c0_10] : memref<1x32xf32, #tpu.memory_space<vmem>>, vector<1x32xf32>
    %11 = vector.broadcast %10 : vector<1x32xf32> to vector<8x32xf32>
    %12 = arith.addf %9, %11 : vector<8x32xf32>
    %cst_11 = arith.constant 0.000000e+00 : f32
    %13 = vector.broadcast %cst_11 : f32 to vector<8x32xf32>
    %14 = arith.maximumf %12, %13 : vector<8x32xf32>
    %c0_12 = arith.constant 0 : index
    %c0_13 = arith.constant 0 : index
    %15 = vector.load %arg6[%c0_12, %c0_13] : memref<32x16xf32, #tpu.memory_space<vmem>>, vector<32x16xf32>
    %cst_14 = arith.constant dense<0.000000e+00> : vector<8x16xf32>
    %16 = tpu.matmul %14, %15, %cst_14 {dimension_numbers = #tpu.dot_dimension_numbers<[1], [0], [0], [1], [0, 0, 1, 1], [], []>} : vector<8x32xf32>, vector<32x16xf32>, vector<8x16xf32> -> vector<8x16xf32>
    %c0_15 = arith.constant 0 : index
    %c0_16 = arith.constant 0 : index
    %17 = vector.load %arg7[%c0_15, %c0_16] : memref<1x16xf32, #tpu.memory_space<vmem>>, vector<1x16xf32>
    %18 = vector.broadcast %17 : vector<1x16xf32> to vector<8x16xf32>
    %19 = arith.addf %16, %18 : vector<8x16xf32>
    %20 = math.tanh %19 : vector<8x16xf32>
    %cst_17 = arith.constant 1.000000e+00 : f32
    %21 = vector.broadcast %cst_17 : f32 to vector<8x16xf32>
    %22 = arith.mulf %21, %20 : vector<8x16xf32>
    %cst_18 = arith.constant -2.000000e+01 : f32
    %cst_19 = arith.constant 2.000000e+00 : f32
    %23 = vector.broadcast %cst_18 : f32 to vector<8x16xf32>
    %24 = arith.maximumf %23, %19 : vector<8x16xf32>
    %25 = vector.broadcast %cst_19 : f32 to vector<8x16xf32>
    %26 = arith.minimumf %25, %24 : vector<8x16xf32>
    %27 = math.exp %26 : vector<8x16xf32>
    %28 = tpu.iota {dimensions = array<i32: 1>} : vector<8x16xi32>
    %c8_i32 = arith.constant 8 : i32
    %29 = vector.broadcast %c8_i32 : i32 to vector<8x16xi32>
    %30 = arith.cmpi slt, %28, %29 : vector<8x16xi32>
    %31 = arith.select %30, %22, %27 : vector<8x16xi1>, vector<8x16xf32>
    %c0_20 = arith.constant 0 : index
    %c0_21 = arith.constant 0 : index
    %32 = vector.load %arg8[%c0_20, %c0_21] : memref<8x16xf32, #tpu.memory_space<vmem>>, vector<8x16xf32>
    tpu.vector_store %arg8[%c0_20, %c0_21], %31 {strides = array<i32>} : memref<8x16xf32, #tpu.memory_space<vmem>>, vector<8x16xf32>,
    return
  }
  func.func @transform_0(%arg0: i32) -> (i32, i32) {
    %c0_i32 = arith.constant 0 : i32
    %c0_i32_0 = arith.constant 0 : i32
    return %arg0, %c0_i32 : i32, i32
  }
  func.func @transform_1(%arg0: i32) -> (i32, i32) {
    %c0_i32 = arith.constant 0 : i32
    %c0_i32_0 = arith.constant 0 : i32
    %c0_i32_1 = arith.constant 0 : i32
    return %c0_i32, %c0_i32_0 : i32, i32
  }
  func.func @transform_2(%arg0: i32) -> (i32, i32) {
    %c0_i32 = arith.constant 0 : i32
    %c0_i32_0 = arith.constant 0 : i32
    %c0_i32_1 = arith.constant 0 : i32
    return %c0_i32, %c0_i32_0 : i32, i32
  }
  func.func @transform_3(%arg0: i32) -> (i32, i32) {
    %c0_i32 = arith.constant 0 : i32
    %c0_i32_0 = arith.constant 0 : i32
    %c0_i32_1 = arith.constant 0 : i32
    return %c0_i32, %c0_i32_0 : i32, i32
  }
  func.func @transform_4(%arg0: i32) -> (i32, i32) {
    %c0_i32 = arith.constant 0 : i32
    %c0_i32_0 = arith.constant 0 : i32
    %c0_i32_1 = arith.constant 0 : i32
    return %c0_i32, %c0_i32_0 : i32, i32
  }
  func.func @transform_5(%arg0: i32) -> (i32, i32) {
    %c0_i32 = arith.constant 0 : i32
    %c0_i32_0 = arith.constant 0 : i32
    %c0_i32_1 = arith.constant 0 : i32
    return %c0_i32, %c0_i32_0 : i32, i32
  }
  func.func @transform_6(%arg0: i32) -> (i32, i32) {
    %c0_i32 = arith.constant 0 : i32
    %c0_i32_0 = arith.constant 0 : i32
    %c0_i32_1 = arith.constant 0 : i32
    return %c0_i32, %c0_i32_0 : i32, i32
  }
  func.func @transform_7(%arg0: i32) -> (i32, i32) {
    %c0_i32 = arith.constant 0 : i32
    %c0_i32_0 = arith.constant 0 : i32
    return %arg0, %c0_i32 : i32, i32
  }
}

</mosaic_0001>

<llo_original>
// kernel: tpu_custom_call.1
$region0: #{tpu_custom_call.1}
  #allocation0 [shape = 'u32[]', space=smem, size = 0x4, offset = 0x4, fixed_abs, tag = 'smem constant byte address 0x4 - core index']
  #allocation1 [shape = 'u32[72,128]{1,0:T(1,128)}', space=vmem, size = 0x9000, scoped, tag = 'internal scratch']
  %s0 = inlined_call_operand.hbm [shape: f32[8,16], index: 0, kind: input, shape index: {}]
  %s1 = inlined_call_operand.vmem [shape: f32[16,32], index: 1, kind: input, shape index: {}]
  %s2 = inlined_call_operand.vmem [shape: f32[1,32], index: 2, kind: input, shape index: {}]
  %s3 = inlined_call_operand.vmem [shape: f32[32,32], index: 3, kind: input, shape index: {}]
  %s4 = inlined_call_operand.vmem [shape: f32[1,32], index: 4, kind: input, shape index: {}]
  %s5 = inlined_call_operand.vmem [shape: f32[32,16], index: 5, kind: input, shape index: {}]
  %s6 = inlined_call_operand.vmem [shape: f32[1,16], index: 6, kind: input, shape index: {}]
  %s7 = inlined_call_operand.hbm [shape: f32[8,16], index: 7, kind: output, shape index: {}]
  %s8 = sld [smem:[#allocation0]]
  $region42: #{tpu_custom_call.1} parent=0
    _
  %s10 = ssub.s32 1, %s8
  %s11 = scalar_select 0, %s10, %s8
  $region1: #{tpu_custom_call.1} parent=0
    #allocation2 [shape = 'u8[4096]{0}', space=vmem, size = 0x1000, scoped, tag = 'input window, operand 0, single buffered']
    #allocation3 [shape = 's32[1]{0}', space=sflag, size = 0x4, scoped, tag = 'scoped memory for tpu_custom_call.1']
    #allocation4 [shape = 's32[1]{0}', space=sflag, size = 0x4, scoped, tag = 'scoped memory for tpu_custom_call.1']
    #allocation5 [shape = 'u8[4096]{0}', space=vmem, size = 0x1000, scoped, tag = 'output window, operand 0, single buffered']
    %12 = vsyncpa [#allocation3], 0
    %13 = vsyncpa [#allocation4], 0
    // Predicated region
    $region2: #{tpu_custom_call.1} parent=1 // pred_check
      _
    $region3: #{tpu_custom_call.1} parent=1 // pred_check_branch
      %15 = sbr.rel (0) target = $region5
    $region4: #{tpu_custom_call.1} parent=1 // pred_region
      %17 = vsyncadd [#allocation3], 0
      %s19 = sshll.u32 %s0, 4
      %s20 = int_to_ptr.hbm [resolvable:$true] %s19
      %s21 = sshll.u32 [#allocation2], 4
      %s22 = int_to_ptr.vmem [resolvable:$true] %s21
      %24 = dma.hbm_to_vmem [thread:$0]  %s20, 128, %s22, [#allocation3]
    $region5: #{tpu_custom_call.1} parent=1 // pred_fallthru
      _
    // Predicated region
    $region6: #{tpu_custom_call.1} parent=1 // pred_check
      _
    $region7: #{tpu_custom_call.1} parent=1 // pred_check_branch
      %26 = sbr.rel (0) target = $region9
    $region8: #{tpu_custom_call.1} parent=1 // pred_region
      _
    $region9: #{tpu_custom_call.1} parent=1 // pred_fallthru
      _
    // Predicated region
    $region10: #{tpu_custom_call.1} parent=1 // pred_check
      _
    $region11: #{tpu_custom_call.1} parent=1 // pred_check_branch
      %28 = sbr.rel (0) target = $region13
    $region12: #{tpu_custom_call.1} parent=1 // pred_region
      _
    $region13: #{tpu_custom_call.1} parent=1 // pred_fallthru
      _
    // Predicated region
    $region14: #{tpu_custom_call.1} parent=1 // pred_check
      _
    $region15: #{tpu_custom_call.1} parent=1 // pred_check_branch
      %30 = sbr.rel (0) target = $region17
    $region16: #{tpu_custom_call.1} parent=1 // pred_region
      _
    $region17: #{tpu_custom_call.1} parent=1 // pred_fallthru
      _
    // Predicated region
    $region18: #{tpu_custom_call.1} parent=1 // pred_check
      _
    $region19: #{tpu_custom_call.1} parent=1 // pred_check_branch
      %32 = sbr.rel (0) target = $region21
    $region20: #{tpu_custom_call.1} parent=1 // pred_region
      _
    $region21: #{tpu_custom_call.1} parent=1 // pred_fallthru
      _
    // Predicated region
    $region22: #{tpu_custom_call.1} parent=1 // pred_check
      _
    $region23: #{tpu_custom_call.1} parent=1 // pred_check_branch
      %34 = sbr.rel (0) target = $region25
    $region24: #{tpu_custom_call.1} parent=1 // pred_region
      _
    $region25: #{tpu_custom_call.1} parent=1 // pred_fallthru
      _
    // Predicated region
    $region26: #{tpu_custom_call.1} parent=1 // pred_check
      _
    $region27: #{tpu_custom_call.1} parent=1 // pred_check_branch
      %36 = sbr.rel (0) target = $region29
    $region28: #{tpu_custom_call.1} parent=1 // pred_region
      _
    $region29: #{tpu_custom_call.1} parent=1 // pred_fallthru
      _
    // Predicated region
    $region30: #{tpu_custom_call.1} parent=1 // pred_check
      _
    $region31: #{tpu_custom_call.1} parent=1 // pred_check_branch
      %38 = sbr.rel (0) target = $region33
    $region32: #{tpu_custom_call.1} parent=1 // pred_region
      %40 = dma.done [#allocation3], 128
    $region33: #{tpu_custom_call.1} parent=1 // pred_fallthru
      _
    %v41 = vld [vmem:[#allocation2] sm:$0xff]
    %v42 = vld [vmem:[%s1] sm:$0xff]
    %v43 = vld [vmem:[%s1 + $0x8] sm:$0xff]
    %v44 = vld [vmem:[%s2] sm:$0x1]
    %v46 = vperm.slane %v44, 0
    %vm48 = vcmask 130048
    %v50 = vsel %vm48, %v41, 0
    %52 = vmatpush.msra.mxu0 0.0
    %53 = vmatpush.msra.mxu0 0.0
    %54 = vmatpush.msra.mxu0 0.0
    %55 = vmatpush.msra.mxu0 0.0
    %56 = vmatpush.msra.mxu0 0.0
    %57 = vmatpush.msra.mxu0 0.0
    %58 = vmatpush.msra.mxu0 0.0
    %59 = vmatpush.msra.mxu0 0.0
    %60 = vmatpush.msra.mxu0 0.0
    %61 = vmatpush.msra.mxu0 0.0
    %62 = vmatpush.msra.mxu0 0.0
    %63 = vmatpush.msra.mxu0 0.0
    %64 = vmatpush.msra.mxu0 0.0
    %65 = vmatpush.msra.mxu0 0.0
    %66 = vmatpush.msra.mxu0 %v43
    %67 = vmatpush.msra.mxu0 %v42
    %68 = vmatmul.f32.gmra.mxu0 %v50
    %v69 = vpop.f32.mrf.mxu0
    %v70 = vadd.f32 %v46, %v69
    %71 = vdwg.mxu0
    %v72 = vmax.f32 %v70, 0.0
    %v73 = vld [vmem:[%s3] sm:$0xff]
    %v74 = vld [vmem:[%s3 + $0x8] sm:$0xff]
    %v75 = vld [vmem:[%s3 + $0x10] sm:$0xff]
    %v76 = vld [vmem:[%s3 + $0x18] sm:$0xff]
    %v77 = vld [vmem:[%s4] sm:$0x1]
    %v79 = vperm.slane %v77, 0
    %vm81 = vcmask 261120
    %v83 = vsel %vm81, %v72, 0
    %85 = vmatpush.msra.mxu0 0.0
    %86 = vmatpush.msra.mxu0 0.0
    %87 = vmatpush.msra.mxu0 0.0
    %88 = vmatpush.msra.mxu0 0.0
    %89 = vmatpush.msra.mxu0 0.0
    %90 = vmatpush.msra.mxu0 0.0
    %91 = vmatpush.msra.mxu0 0.0
    %92 = vmatpush.msra.mxu0 0.0
    %93 = vmatpush.msra.mxu0 0.0
    %94 = vmatpush.msra.mxu0 0.0
    %95 = vmatpush.msra.mxu0 0.0
    %96 = vmatpush.msra.mxu0 0.0
    %97 = vmatpush.msra.mxu0 %v76
    %98 = vmatpush.msra.mxu0 %v75
    %99 = vmatpush.msra.mxu0 %v74
    %100 = vmatpush.msra.mxu0 %v73
    %101 = vmatmul.f32.gmra.mxu0 %v83
    %v102 = vpop.f32.mrf.mxu0
    %v103 = vadd.f32 %v79, %v102
    %104 = vdwg.mxu0
    %v105 = vmax.f32 %v103, 0.0
    %v106 = vld [vmem:[%s5] sm:$0xff]
    %v107 = vld [vmem:[%s5 + $0x8] sm:$0xff]
    %v108 = vld [vmem:[%s5 + $0x10] sm:$0xff]
    %v109 = vld [vmem:[%s5 + $0x18] sm:$0xff]
    %v110 = vld [vmem:[%s6] sm:$0x1]
    %v112 = vperm.slane %v110, 0
    %v115 = vsel %vm81, %v105, 0
    %117 = vmatpush.msra.mxu0 0.0
    %118 = vmatpush.msra.mxu0 0.0
    %119 = vmatpush.msra.mxu0 0.0
    %120 = vmatpush.msra.mxu0 0.0
    %121 = vmatpush.msra.mxu0 0.0
    %122 = vmatpush.msra.mxu0 0.0
    %123 = vmatpush.msra.mxu0 0.0
    %124 = vmatpush.msra.mxu0 0.0
    %125 = vmatpush.msra.mxu0 0.0
    %126 = vmatpush.msra.mxu0 0.0
    %127 = vmatpush.msra.mxu0 0.0
    %128 = vmatpush.msra.mxu0 0.0
    %129 = vmatpush.msra.mxu0 %v109
    %130 = vmatpush.msra.mxu0 %v108
    %131 = vmatpush.msra.mxu0 %v107
    %132 = vmatpush.msra.mxu0 %v106
    %133 = vmatmul.f32.gmra.mxu0 %v115
    %v134 = vpop.f32.mrf.mxu0
    %v135 = vadd.f32 %v112, %v134
    %136 = vdwg.mxu0
    %v137 = vtanh.pop %v135
    %v138 = vmax.f32 %v135, -20.0
    %v139 = vmin.f32 %v138, 2.0
    %v140 = vmul.f32 %v139, 1.442695
    %v141 = vpow.pop %v140
    %v142 = vlaneseq
    %v143 = vand.u32 %v142, 127
    %vm144 = vcmp.lt.s32.totalorder %v143, 8
    %v145 = vsel %vm144, %v137, %v141
    %146 = vst.msk [vmem:[#allocation5] sm:$0xff] %vm48, %v145
    // Predicated region
    $region34: #{tpu_custom_call.1} parent=1 // pred_check
      _
    $region35: #{tpu_custom_call.1} parent=1 // pred_check_branch
      %148 = sbr.rel (0) target = $region37
    $region36: #{tpu_custom_call.1} parent=1 // pred_region
      %150 = vsyncadd [#allocation4], 0
      %s152 = sshll.u32 [#allocation5], 4
      %s153 = int_to_ptr.vmem [resolvable:$true] %s152
      %s154 = sshll.u32 %s7, 4
      %s155 = int_to_ptr.hbm [resolvable:$true] %s154
      %157 = dma.vmem_to_hbm [thread:$0]  %s153, 128, %s155, [#allocation4]
    $region37: #{tpu_custom_call.1} parent=1 // pred_fallthru
      _
    // Predicated region
    $region38: #{tpu_custom_call.1} parent=1 // pred_check
      _
    $region39: #{tpu_custom_call.1} parent=1 // pred_check_branch
      %159 = sbr.rel (0) target = $region41
    $region40: #{tpu_custom_call.1} parent=1 // pred_region
      %161 = dma.done [#allocation4], 128
    $region41: #{tpu_custom_call.1} parent=1 // pred_fallthru
      _
    %162 = vsyncpa [#allocation3], 1
    %163 = vsyncpa [#allocation4], 1

</llo_original>
